<compile_context>
chip_gen: v7x
topology: tpu7x:2x2x1
jax: 0.10.0
libtpu: 0.0.40
codegen_flags: <defaults>
</compile_context>

<pallas_src>
import functools

import jax
import jax.numpy as jnp
from jax import lax
from jax.experimental import pallas as pl
from jax.experimental.pallas import tpu as pltpu


# ----------------------------------------------------------------------------
# Kernel 1: FC head.  Layer-1 weight streamed in 256-column bf16 blocks, layer-2
# contraction fused into the same loop via a (B, 20) accumulator scratch.
# ----------------------------------------------------------------------------
_FC_TN = 256  # layer-1 output columns (== layer-2 reduction rows) per grid step


def _stn_fc_kernel(x_ref, w1_ref, b1_ref, w2_ref, b2_ref, w3_ref, b3_ref,
                   theta_ref, h2_ref):
    i = pl.program_id(0)

    @pl.when(i == 0)
    def _():
        h2_ref[...] = jnp.zeros_like(h2_ref)

    # Layer 1 column block (bf16 weights on the MXU, f32 accumulation) + ReLU.
    # nn.Dropout(0.5): eval-mode identity (inference semantics).
    # TODO(synk): train-mode dropout (RNG mask + 2x scale) not implemented.
    x = x_ref[...].astype(jnp.bfloat16)
    h1_blk = jnp.dot(x, w1_ref[...], preferred_element_type=jnp.float32)
    h1_blk = jnp.maximum(h1_blk + b1_ref[...], 0.0)
    # Immediately contract with the matching row block of w2 so only a tiny
    # (B, 20) accumulator stays live across grid steps (no big h1 scratch).
    h2_ref[...] += jnp.dot(h1_blk, w2_ref[...],
                           preferred_element_type=jnp.float32)

    # Layers 2/3 epilogue + masked tanh on the final step.
    @pl.when(i == pl.num_programs(0) - 1)
    def _():
        h2 = jnp.maximum(h2_ref[...] + b2_ref[...], 0.0)         # ReLU
        th = jnp.dot(h2, w3_ref[...],
                     preferred_element_type=jnp.float32) + b3_ref[...]
        # tanh on columns [0,1,3,4] of the 6-vector (the 2x2 linear part).
        col = lax.broadcasted_iota(jnp.int32, th.shape, 1)
        theta_ref[...] = jnp.where((col % 3) != 2, jnp.tanh(th), th)


def stn_fc(x_flat, w1, b1, w2, b2, w3, b3):
    B, K = x_flat.shape
    N1 = w1.shape[1]
    tn = _FC_TN
    n_pad = ((N1 + tn - 1) // tn) * tn            # 1000 -> 1024
    nb = n_pad // tn
    # Pad the hidden dim once in HBM; bf16 halves the dominant (memory-bound)
    # w1 DMA.  Padded columns give relu(0)=0 and padded w2 rows are 0 -> exact.
    w1p = jnp.pad(w1, ((0, 0), (0, n_pad - N1))).astype(jnp.bfloat16)
    b1p = jnp.pad(b1, ((0, 0), (0, n_pad - N1)))
    w2p = jnp.pad(w2, ((0, n_pad - N1), (0, 0)))

    grid_spec = pltpu.PrefetchScalarGridSpec(
        num_scalar_prefetch=0,
        grid=(nb,),
        in_specs=[
            pl.BlockSpec((B, K), lambda i: (0, 0)),        # x (fetched once)
            pl.BlockSpec((K, tn), lambda i: (0, i)),       # w1 block (pipelined)
            pl.BlockSpec((1, tn), lambda i: (0, i)),       # b1 block
            pl.BlockSpec((tn, 20), lambda i: (i, 0)),      # w2 row block
            pl.BlockSpec(b2.shape, lambda i: (0, 0)),
            pl.BlockSpec(w3.shape, lambda i: (0, 0)),
            pl.BlockSpec(b3.shape, lambda i: (0, 0)),
        ],
        out_specs=pl.BlockSpec((B, 6), lambda i: (0, 0)),
        scratch_shapes=[pltpu.VMEM((B, 20), jnp.float32)],
    )
    return pl.pallas_call(
        _stn_fc_kernel,
        out_shape=jax.ShapeDtypeStruct((B, 6), jnp.float32),
        grid_spec=grid_spec,
        compiler_params=pltpu.CompilerParams(
            dimension_semantics=("arbitrary",)),
    )(x_flat, w1p, b1p, w2p, b2, w3, b3)


# ----------------------------------------------------------------------------
# Kernel 2: affine_grid + bilinear grid_sample (zeros padding, align_corners=False).
# Grid = (batch, destination-pixel tiles of 128 lanes).  For each tile a
# (HW_src, 128) separable tent weight slab is built on the VPU and contracted
# with the (C, HW_src) image on the MXU.
# ----------------------------------------------------------------------------
def _grid_sample_kernel(theta_ref, base_ref, img_ref, out_ref, *, H, W):
    HW = H * W
    t = theta_ref[...]                                    # (1, 6)
    xb = base_ref[0:1, :]                                 # (1, TD) normalized x
    yb = base_ref[1:2, :]                                 # (1, TD) normalized y

    # Affine transform of the base grid, then grid_sample un-normalization
    # (align_corners=False).
    xs = t[0, 0] * xb + t[0, 1] * yb + t[0, 2]
    ys = t[0, 3] * xb + t[0, 4] * yb + t[0, 5]
    ix = ((xs + 1.0) * W - 1.0) * 0.5                     # (1, TD) src x coord
    iy = ((ys + 1.0) * H - 1.0) * 0.5                     # (1, TD) src y coord

    # Source-pixel coordinates on the sublane axis.
    q = lax.broadcasted_iota(jnp.int32, (HW, 1), 0)
    qx = (q % W).astype(jnp.float32)
    qy = (q // W).astype(jnp.float32)

    # Separable tent (hat) weights == bilinear with zeros padding: any corner
    # that falls outside the image is >= 1 away from every real pixel -> 0.
    wx = jnp.maximum(1.0 - jnp.abs(ix - qx), 0.0)         # (HW, TD)
    wy = jnp.maximum(1.0 - jnp.abs(iy - qy), 0.0)         # (HW, TD)
    m = wx * wy

    out_ref[...] = jnp.dot(img_ref[...], m, preferred_element_type=jnp.float32)


def stn_grid_sample(theta, img2d, base_xy, H, W):
    B, C, HW = img2d.shape
    TD = 128 if HW % 128 == 0 else HW                     # destination tile width
    n_td = HW // TD
    kernel = functools.partial(_grid_sample_kernel, H=H, W=W)
    return pl.pallas_call(
        kernel,
        out_shape=jax.ShapeDtypeStruct((B, C, HW), jnp.float32),
        grid=(B, n_td),
        in_specs=[
            pl.BlockSpec((1, 6), lambda b, t: (b, 0)),          # theta row
            pl.BlockSpec((2, TD), lambda b, t: (0, t)),         # base grid tile
            pl.BlockSpec((None, C, HW), lambda b, t: (b, 0, 0)),  # whole image
        ],
        out_specs=pl.BlockSpec((None, C, TD), lambda b, t: (b, 0, t)),
        compiler_params=pltpu.CompilerParams(
            dimension_semantics=("parallel", "arbitrary")),
    )(theta, base_xy, img2d)


# ----------------------------------------------------------------------------
# Full module forward (glue is plain JAX reshapes + a one-time base-grid const).
# ----------------------------------------------------------------------------
def _make_base_grid(H, W):
    p = jnp.arange(H * W, dtype=jnp.int32)
    pw = (p % W).astype(jnp.float32)
    ph = (p // W).astype(jnp.float32)
    x = (2.0 * pw + 1.0) / W - 1.0                        # align_corners=False
    y = (2.0 * ph + 1.0) / H - 1.0
    return jnp.stack([x, y], axis=0)                      # (2, HW)


def stn_module_forward(img, params):
    w1, b1, w2, b2, w3, b3 = params
    B, C, H, W = img.shape
    x_flat = img.reshape(B, C * H * W)                    # == torch img.view(B, -1)
    theta = stn_fc(x_flat, w1, b1, w2, b2, w3, b3)        # (B, 6), tanh on [0,1,3,4]
    base_xy = _make_base_grid(H, W)
    img2d = img.reshape(B, C, H * W)
    out2d = stn_grid_sample(theta, img2d, base_xy, H, W)
    return out2d.reshape(B, C, H, W)


# ----------------------------------------------------------------------------
# Pure-JAX reference (gather-based bilinear) for a correctness cross-check.
# ----------------------------------------------------------------------------
def _ref_forward(img, params):
    w1, b1, w2, b2, w3, b3 = params
    B, C, H, W = img.shape
    x = img.reshape(B, -1)
    h1 = jnp.maximum(x @ w1 + b1, 0.0)
    h2 = jnp.maximum(h1 @ w2 + b2, 0.0)
    th = h2 @ w3 + b3
    col = jnp.arange(6)[None, :]
    th = jnp.where((col % 3) != 2, jnp.tanh(th), th)      # (B, 6)

    xw = (2.0 * jnp.arange(W, dtype=jnp.float32) + 1.0) / W - 1.0
    yh = (2.0 * jnp.arange(H, dtype=jnp.float32) + 1.0) / H - 1.0
    X, Y = jnp.meshgrid(xw, yh)                           # (H, W) each
    xs = th[:, 0, None, None] * X + th[:, 1, None, None] * Y + th[:, 2, None, None]
    ys = th[:, 3, None, None] * X + th[:, 4, None, None] * Y + th[:, 5, None, None]
    ix = ((xs + 1.0) * W - 1.0) * 0.5
    iy = ((ys + 1.0) * H - 1.0) * 0.5
    x0 = jnp.floor(ix); x1 = x0 + 1.0
    y0 = jnp.floor(iy); y1 = y0 + 1.0

    def gather(xc, yc):
        valid = (xc >= 0) & (xc <= W - 1) & (yc >= 0) & (yc <= H - 1)
        xi = jnp.clip(xc, 0, W - 1).astype(jnp.int32)
        yi = jnp.clip(yc, 0, H - 1).astype(jnp.int32)
        b_idx = jnp.arange(B)[:, None, None, None]
        c_idx = jnp.arange(C)[None, :, None, None]
        v = img[b_idx, c_idx, yi[:, None], xi[:, None]]   # (B, C, H, W)
        return v * valid[:, None].astype(img.dtype)

    wx1 = ix - x0; wx0 = 1.0 - wx1
    wy1 = iy - y0; wy0 = 1.0 - wy1
    out = (gather(x0, y0) * (wx0 * wy0)[:, None]
           + gather(x1, y0) * (wx1 * wy0)[:, None]
           + gather(x0, y1) * (wx0 * wy1)[:, None]
           + gather(x1, y1) * (wx1 * wy1)[:, None])
    return out


if __name__ == "__main__":
    img_size = 16
    batch = 2
    channels = 3                                  # module hard-codes 3 channels

    key = jax.random.PRNGKey(0)
    k_img, k_w1, k_w2 = jax.random.split(key, 3)
    img = jax.random.normal(k_img, (batch, channels, img_size, img_size),
                            jnp.float32)

    in_dim = channels * img_size * img_size       # 768
    # Deterministic synthetic parameters (weights stored as (in, out)).
    w1 = jax.random.normal(k_w1, (in_dim, 1000), jnp.float32) * 0.02
    b1 = jnp.zeros((1, 1000), jnp.float32)
    w2 = jax.random.normal(k_w2, (1000, 20), jnp.float32) * 0.02
    b2 = jnp.zeros((1, 20), jnp.float32)
    # Final layer per module __init__: weight = 0, bias = identity transform.
    w3 = jnp.zeros((20, 6), jnp.float32)
    b3 = jnp.array([[1.0, 0.0, 0.0, 0.0, 1.0, 0.0]], jnp.float32)
    params = (w1, b1, w2, b2, w3, b3)

    out = stn_module_forward(img, params)
    jax.block_until_ready(out)
    assert out.shape == (batch, channels, img_size, img_size)

    # Cross-check against a gather-based pure-JAX reference.  Loose tolerance:
    # bf16 layer-1 weights + MXU f32 pass precision.
    ref = _ref_forward(img, params)
    err = float(jnp.max(jnp.abs(out - ref)))
    assert err < 0.1, f"max abs error vs reference: {err}"
    print("KERNEL_OK")
</pallas_src>

<mosaic_0001>
module attributes {stable_mosaic.version = 11 : i64} {
  func.func @_stn_fc_kernel(%arg0: i32, %arg1: memref<2x768xf32, #tpu.memory_space<vmem>>, %arg2: memref<768x256xbf16, #tpu.memory_space<vmem>>, %arg3: memref<1x256xf32, #tpu.memory_space<vmem>>, %arg4: memref<256x20xf32, #tpu.memory_space<vmem>>, %arg5: memref<1x20xf32, #tpu.memory_space<vmem>>, %arg6: memref<20x6xf32, #tpu.memory_space<vmem>>, %arg7: memref<1x6xf32, #tpu.memory_space<vmem>>, %arg8: memref<2x6xf32, #tpu.memory_space<vmem>>, %arg9: memref<2x20xf32, #tpu.memory_space<vmem>>) attributes {dimension_semantics = [#tpu.dimension_semantics<arbitrary>], iteration_bounds = array<i64: 4>, scalar_prefetch = 0 : i64, scratch_operands = 1 : i64, tpu.core_type = #tpu.core_type<tc>, window_params = [{pipeline_mode = #tpu.pipeline_mode<synchronous>, transform_indices = @transform_0, window_bounds = array<i64: 2, 768>}, {transform_indices = @transform_1, window_bounds = array<i64: 768, 256>}, {transform_indices = @transform_2, window_bounds = array<i64: 1, 256>}, {transform_indices = @transform_3, window_bounds = array<i64: 256, 20>}, {pipeline_mode = #tpu.pipeline_mode<synchronous>, transform_indices = @transform_4, window_bounds = array<i64: 1, 20>}, {pipeline_mode = #tpu.pipeline_mode<synchronous>, transform_indices = @transform_5, window_bounds = array<i64: 20, 6>}, {pipeline_mode = #tpu.pipeline_mode<synchronous>, transform_indices = @transform_6, window_bounds = array<i64: 1, 6>}, {pipeline_mode = #tpu.pipeline_mode<synchronous>, transform_indices = @transform_7, window_bounds = array<i64: 2, 6>}]} {
    %c0_i32 = arith.constant 0 : i32
    %0 = arith.cmpi eq, %arg0, %c0_i32 : i32
    %1 = arith.extui %0 : i1 to i32
    %c0_i32_0 = arith.constant 0 : i32
    %2 = arith.cmpi ne, %1, %c0_i32_0 : i32
    scf.if %2 {
      %cst_15 = arith.constant 0.000000e+00 : f32
      %20 = vector.broadcast %cst_15 : f32 to vector<2x20xf32>
      %c0_16 = arith.constant 0 : index
      %c0_17 = arith.constant 0 : index
      %21 = vector.load %arg9[%c0_16, %c0_17] : memref<2x20xf32, #tpu.memory_space<vmem>>, vector<2x20xf32>
      tpu.vector_store %arg9[%c0_16, %c0_17], %20 {strides = array<i32>} : memref<2x20xf32, #tpu.memory_space<vmem>>, vector<2x20xf32>,
    } else {
    }
    %c0 = arith.constant 0 : index
    %c0_1 = arith.constant 0 : index
    %3 = vector.load %arg1[%c0, %c0_1] : memref<2x768xf32, #tpu.memory_space<vmem>>, vector<2x768xf32>
    %4 = arith.truncf %3 : vector<2x768xf32> to vector<2x768xbf16>
    %c0_2 = arith.constant 0 : index
    %c0_3 = arith.constant 0 : index
    %5 = vector.load %arg2[%c0_2, %c0_3] : memref<768x256xbf16, #tpu.memory_space<vmem>>, vector<768x256xbf16>
    %cst = arith.constant dense<0.000000e+00> : vector<2x256xf32>
    %6 = tpu.matmul %4, %5, %cst {dimension_numbers = #tpu.dot_dimension_numbers<[1], [0], [0], [1], [0, 0, 1, 1], [], []>} : vector<2x768xbf16>, vector<768x256xbf16>, vector<2x256xf32> -> vector<2x256xf32>
    %c0_4 = arith.constant 0 : index
    %c0_5 = arith.constant 0 : index
    %7 = vector.load %arg3[%c0_4, %c0_5] : memref<1x256xf32, #tpu.memory_space<vmem>>, vector<1x256xf32>
    %8 = vector.broadcast %7 : vector<1x256xf32> to vector<2x256xf32>
    %9 = arith.addf %6, %8 : vector<2x256xf32>
    %cst_6 = arith.constant 0.000000e+00 : f32
    %10 = vector.broadcast %cst_6 : f32 to vector<2x256xf32>
    %11 = arith.maximumf %9, %10 : vector<2x256xf32>
    %c0_7 = arith.constant 0 : index
    %c0_8 = arith.constant 0 : index
    %12 = vector.load %arg9[%c0_7, %c0_8] : memref<2x20xf32, #tpu.memory_space<vmem>>, vector<2x20xf32>
    %c0_9 = arith.constant 0 : index
    %c0_10 = arith.constant 0 : index
    %13 = vector.load %arg4[%c0_9, %c0_10] : memref<256x20xf32, #tpu.memory_space<vmem>>, vector<256x20xf32>
    %cst_11 = arith.constant dense<0.000000e+00> : vector<2x20xf32>
    %14 = tpu.matmul %11, %13, %cst_11 {dimension_numbers = #tpu.dot_dimension_numbers<[1], [0], [0], [1], [0, 0, 1, 1], [], []>} : vector<2x256xf32>, vector<256x20xf32>, vector<2x20xf32> -> vector<2x20xf32>
    %15 = arith.addf %12, %14 : vector<2x20xf32>
    %c0_12 = arith.constant 0 : index
    %c0_13 = arith.constant 0 : index
    %16 = vector.load %arg9[%c0_12, %c0_13] : memref<2x20xf32, #tpu.memory_space<vmem>>, vector<2x20xf32>
    tpu.vector_store %arg9[%c0_12, %c0_13], %15 {strides = array<i32>} : memref<2x20xf32, #tpu.memory_space<vmem>>, vector<2x20xf32>,
    %c3_i32 = arith.constant 3 : i32
    %17 = arith.cmpi eq, %arg0, %c3_i32 : i32
    %18 = arith.extui %17 : i1 to i32
    %c0_i32_14 = arith.constant 0 : i32
    %19 = arith.cmpi ne, %18, %c0_i32_14 : i32
    scf.if %19 {
      %c0_15 = arith.constant 0 : index
      %c0_16 = arith.constant 0 : index
      %20 = vector.load %arg9[%c0_15, %c0_16] : memref<2x20xf32, #tpu.memory_space<vmem>>, vector<2x20xf32>
      %c0_17 = arith.constant 0 : index
      %c0_18 = arith.constant 0 : index
      %21 = vector.load %arg5[%c0_17, %c0_18] : memref<1x20xf32, #tpu.memory_space<vmem>>, vector<1x20xf32>
      %22 = vector.broadcast %21 : vector<1x20xf32> to vector<2x20xf32>
      %23 = arith.addf %20, %22 : vector<2x20xf32>
      %cst_19 = arith.constant 0.000000e+00 : f32
      %24 = vector.broadcast %cst_19 : f32 to vector<2x20xf32>
      %25 = arith.maximumf %23, %24 : vector<2x20xf32>
      %c0_20 = arith.constant 0 : index
      %c0_21 = arith.constant 0 : index
      %26 = vector.load %arg6[%c0_20, %c0_21] : memref<20x6xf32, #tpu.memory_space<vmem>>, vector<20x6xf32>
      %cst_22 = arith.constant dense<0.000000e+00> : vector<2x6xf32>
      %27 = tpu.matmul %25, %26, %cst_22 {dimension_numbers = #tpu.dot_dimension_numbers<[1], [0], [0], [1], [0, 0, 1, 1], [], []>} : vector<2x20xf32>, vector<20x6xf32>, vector<2x6xf32> -> vector<2x6xf32>
      %c0_23 = arith.constant 0 : index
      %c0_24 = arith.constant 0 : index
      %28 = vector.load %arg7[%c0_23, %c0_24] : memref<1x6xf32, #tpu.memory_space<vmem>>, vector<1x6xf32>
      %29 = vector.broadcast %28 : vector<1x6xf32> to vector<2x6xf32>
      %30 = arith.addf %27, %29 : vector<2x6xf32>
      %31 = tpu.iota {dimensions = array<i32: 1>} : vector<2x6xi32>
      %c3_i32_25 = arith.constant 3 : i32
      %c0_i32_26 = arith.constant 0 : i32
      %32 = arith.cmpi eq, %c3_i32_25, %c0_i32_26 : i32
      %c1_i32 = arith.constant 1 : i32
      %33 = arith.select %32, %c1_i32, %c3_i32_25 : i32
      %34 = vector.broadcast %33 : i32 to vector<2x6xi32>
      %35 = arith.remsi %31, %34 : vector<2x6xi32>
      %c0_i32_27 = arith.constant 0 : i32
      %36 = vector.broadcast %c0_i32_27 : i32 to vector<2x6xi32>
      %37 = arith.cmpi ne, %35, %36 : vector<2x6xi32>
      %c0_i32_28 = arith.constant 0 : i32
      %38 = vector.broadcast %c0_i32_28 : i32 to vector<2x6xi32>
      %39 = arith.cmpi slt, %35, %38 : vector<2x6xi32>
      %c0_i32_29 = arith.constant 0 : i32
      %40 = arith.cmpi slt, %33, %c0_i32_29 : i32
      %41 = vector.broadcast %40 : i1 to vector<2x6xi1>
      %42 = vector.broadcast %41 : vector<2x6xi1> to vector<2x6xi1>
      %43 = arith.xori %39, %42 : vector<2x6xi1>
      %44 = arith.andi %43, %37 : vector<2x6xi1>
      %45 = vector.broadcast %33 : i32 to vector<2x6xi32>
      %46 = arith.addi %35, %45 : vector<2x6xi32>
      %47 = arith.select %44, %46, %35 : vector<2x6xi1>, vector<2x6xi32>
      %c2_i32 = arith.constant 2 : i32
      %48 = vector.broadcast %c2_i32 : i32 to vector<2x6xi32>
      %49 = arith.cmpi ne, %47, %48 : vector<2x6xi32>
      %50 = math.tanh %30 : vector<2x6xf32>
      %51 = arith.select %49, %50, %30 : vector<2x6xi1>, vector<2x6xf32>
      %c0_30 = arith.constant 0 : index
      %c0_31 = arith.constant 0 : index
      %52 = vector.load %arg8[%c0_30, %c0_31] : memref<2x6xf32, #tpu.memory_space<vmem>>, vector<2x6xf32>
      tpu.vector_store %arg8[%c0_30, %c0_31], %51 {strides = array<i32>} : memref<2x6xf32, #tpu.memory_space<vmem>>, vector<2x6xf32>,
    } else {
    }
    return
  }
  func.func @transform_0(%arg0: i32) -> (i32, i32) {
    %c0_i32 = arith.constant 0 : i32
    %c0_i32_0 = arith.constant 0 : i32
    %c0_i32_1 = arith.constant 0 : i32
    return %c0_i32, %c0_i32_0 : i32, i32
  }
  func.func @transform_1(%arg0: i32) -> (i32, i32) {
    %c0_i32 = arith.constant 0 : i32
    %c0_i32_0 = arith.constant 0 : i32
    return %c0_i32, %arg0 : i32, i32
  }
  func.func @transform_2(%arg0: i32) -> (i32, i32) {
    %c0_i32 = arith.constant 0 : i32
    %c0_i32_0 = arith.constant 0 : i32
    return %c0_i32, %arg0 : i32, i32
  }
  func.func @transform_3(%arg0: i32) -> (i32, i32) {
    %c0_i32 = arith.constant 0 : i32
    %c0_i32_0 = arith.constant 0 : i32
    return %arg0, %c0_i32 : i32, i32
  }
  func.func @transform_4(%arg0: i32) -> (i32, i32) {
    %c0_i32 = arith.constant 0 : i32
    %c0_i32_0 = arith.constant 0 : i32
    %c0_i32_1 = arith.constant 0 : i32
    return %c0_i32, %c0_i32_0 : i32, i32
  }
  func.func @transform_5(%arg0: i32) -> (i32, i32) {
    %c0_i32 = arith.constant 0 : i32
    %c0_i32_0 = arith.constant 0 : i32
    %c0_i32_1 = arith.constant 0 : i32
    return %c0_i32, %c0_i32_0 : i32, i32
  }
  func.func @transform_6(%arg0: i32) -> (i32, i32) {
    %c0_i32 = arith.constant 0 : i32
    %c0_i32_0 = arith.constant 0 : i32
    %c0_i32_1 = arith.constant 0 : i32
    return %c0_i32, %c0_i32_0 : i32, i32
  }
  func.func @transform_7(%arg0: i32) -> (i32, i32) {
    %c0_i32 = arith.constant 0 : i32
    %c0_i32_0 = arith.constant 0 : i32
    %c0_i32_1 = arith.constant 0 : i32
    return %c0_i32, %c0_i32_0 : i32, i32
  }
}

</mosaic_0001>

<llo_original>
// kernel: tpu_custom_call.1
$region0: #{tpu_custom_call.1}
  #allocation0 [shape = 'u32[]', space=smem, size = 0x4, offset = 0x4, fixed_abs, tag = 'smem constant byte address 0x4 - core index']
  #allocation1 [shape = 'u32[144,128]{1,0:T(1,128)}', space=vmem, size = 0x12000, scoped, tag = 'internal scratch']
  #allocation2 [shape = 'f32[2,20]{1,0:T(2,128)}', space=vmem, size = 0x400, scoped, tag = 'scratch operand']
  %s0 = inlined_call_operand.hbm [shape: f32[2,768], index: 0, kind: input, shape index: {}]
  %s1 = inlined_call_operand.hbm [shape: bf16[768,1024], index: 1, kind: input, shape index: {}]
  %s2 = inlined_call_operand.hbm [shape: f32[1,1024], index: 2, kind: input, shape index: {}]
  %s3 = inlined_call_operand.vmem [shape: f32[1024,20], index: 3, kind: input, shape index: {}]
  %s4 = inlined_call_operand.hbm [shape: f32[1,20], index: 4, kind: input, shape index: {}]
  %s5 = inlined_call_operand.vmem [shape: f32[20,6], index: 5, kind: input, shape index: {}]
  %s6 = inlined_call_operand.hbm [shape: f32[1,6], index: 6, kind: input, shape index: {}]
  %s7 = inlined_call_operand.hbm [shape: f32[2,6], index: 7, kind: output, shape index: {}]
  %s8 = sld [smem:[#allocation0]]
  $region89: #{tpu_custom_call.1} parent=0
    _
  %s10 = ssub.s32 1, %s8
  %s11 = scalar_select 0, %s10, %s8
  $region1: #{tpu_custom_call.1} parent=0
    #allocation3 [shape = 'u8[6144]{0}', space=vmem, size = 0x1800, scoped, tag = 'input window, operand 0, single buffered']
    #allocation4 [shape = 's32[2]{0}', space=sflag, size = 0x8, scoped, tag = 'scoped memory for tpu_custom_call.1']
    #allocation5 [shape = 's32[2]{0}', space=sflag, size = 0x8, scoped, tag = 'scoped memory for tpu_custom_call.1']
    #allocation6 [shape = 'u8[786432]{0}', space=vmem, size = 0xc0000, scoped, tag = 'input window, operand 1']
    #allocation7 [shape = 's32[2]{0}', space=sflag, size = 0x8, scoped, tag = 'scoped memory for tpu_custom_call.1']
    #allocation8 [shape = 'u8[2048]{0}', space=vmem, size = 0x800, scoped, tag = 'input window, operand 2']
    #allocation9 [shape = 'u8[512]{0}', space=vmem, size = 0x400, scoped, tag = 'input window, operand 4, single buffered']
    #allocation10 [shape = 's32[1]{0}', space=sflag, size = 0x4, scoped, tag = 'scoped memory for tpu_custom_call.1']
    #allocation11 [shape = 'u8[512]{0}', space=vmem, size = 0x400, scoped, tag = 'input window, operand 6, single buffered']
    #allocation12 [shape = 'u8[1024]{0}', space=vmem, size = 0x400, scoped, tag = 'output window, operand 0, single buffered']
    %12 = vsyncpa [#allocation4], 0
    %13 = vsyncpa [#allocation7], 0
    %s14 = scalar_lea.sflag [#allocation7], 1
    %15 = vsyncpa %s14, 0
    %16 = vsyncpa [#allocation10], 0
    %17 = vsyncpa [#allocation5], 0
    loop: start=0, step=1, limit=6
    $region2: #{tpu_custom_call.1} parent=1 // loop_pre_header
      _
    $region3: #{tpu_custom_call.1} parent=1 // loop_header
      %s19 = sphi 0, %s23
      %p20 = scmp.ge.s32.totalorder %s19, 6
      %s27 = sphi 0, %s27
      %s29 = sphi 0, %s27
      %s30 = sphi 0, %s29
      %s44 = sphi 0, %s30
      %s50 = sphi 0, %s52
      %s53 = sphi 0, %s50
      %s54 = sphi 0, %s53
      %s70 = sphi 0, %s54
      %s76 = sphi 0, %s78
      %s79 = sphi 0, %s76
      %s80 = sphi 0, %s79
      %s96 = sphi 0, %s80
      %s102 = sphi 0, %s104
      %s105 = sphi 0, %s102
      %s106 = sphi 0, %s105
      %s122 = sphi 0, %s106
      %s126 = sphi 0, %s126
      %s128 = sphi 0, %s126
      %s129 = sphi 0, %s128
      %s143 = sphi 0, %s129
      %s147 = sphi 0, %s147
      %s149 = sphi 0, %s147
      %s150 = sphi 0, %s149
      %s164 = sphi 0, %s150
      %s168 = sphi 0, %s168
      %s170 = sphi 0, %s168
      %s171 = sphi 0, %s170
      %s185 = sphi 0, %s171
      %s189 = sphi 0, %s189
      %s191 = sphi 0, %s189
      %s192 = sphi 0, %s191
      %s206 = sphi 0, %s192
    $region4: #{tpu_custom_call.1} parent=1 // loop_header_branch
      %22 = sbr.rel (%p20) target = $region8
    $region5: #{tpu_custom_call.1} parent=1 // loop_body
      %s24 = ssub.s32 %s19, 1
      %s25 = ssub.s32 %s19, 2
      %s26 = sadd.s32 %s19, 1
      %s28 = sadd.s32 %s27, 1
      %p31 = scmp.eq.s32.totalorder %s19, 3
      %p32 = scmp.ne.s32.totalorder %s27, %s29
      %p33 = scmp.eq.s32.totalorder %s19, 0
      %p34 = por %p32, %p33
      %p35 = scmp.ne.s32.totalorder %s27, %s29
      %p36 = scmp.eq.s32.totalorder %s24, 3
      %p37 = por %p35, %p36
      %p38 = scmp.ne.s32.totalorder %s29, %s30
      %p39 = scmp.eq.s32.totalorder %s24, 0
      %p40 = por %p38, %p39
      %p41 = scmp.ne.s32.totalorder %s29, %s30
      %p42 = scmp.eq.s32.totalorder %s25, 3
      %p43 = por %p41, %p42
      %p45 = scmp.ne.s32.totalorder %s30, %s44
      %p46 = scmp.eq.s32.totalorder %s25, 0
      %p47 = por %p45, %p46
      %s48 = ssub.s32 %s19, %s26
      %p49 = scmp.eq.s32.totalorder %s48, 0
      %s51 = sadd.s32 %s50, 1
      %s52 = scalar_select %p49, %s50, %s51
      %p55 = pneg %p49
      %p56 = scmp.eq.s32.totalorder %s19, 3
      %p57 = por %p55, %p56
      %p58 = scmp.ne.s32.totalorder %s50, %s53
      %p59 = scmp.eq.s32.totalorder %s19, 0
      %p60 = por %p58, %p59
      %p61 = scmp.ne.s32.totalorder %s50, %s53
      %p62 = scmp.eq.s32.totalorder %s24, 3
      %p63 = por %p61, %p62
      %p64 = scmp.ne.s32.totalorder %s53, %s54
      %p65 = scmp.eq.s32.totalorder %s24, 0
      %p66 = por %p64, %p65
      %p67 = scmp.ne.s32.totalorder %s53, %s54
      %p68 = scmp.eq.s32.totalorder %s25, 3
      %p69 = por %p67, %p68
      %p71 = scmp.ne.s32.totalorder %s54, %s70
      %p72 = scmp.eq.s32.totalorder %s25, 0
      %p73 = por %p71, %p72
      %s74 = ssub.s32 %s19, %s26
      %p75 = scmp.eq.s32.totalorder %s74, 0
      %s77 = sadd.s32 %s76, 1
      %s78 = scalar_select %p75, %s76, %s77
      %p81 = pneg %p75
      %p82 = scmp.eq.s32.totalorder %s19, 3
      %p83 = por %p81, %p82
      %p84 = scmp.ne.s32.totalorder %s76, %s79
      %p85 = scmp.eq.s32.totalorder %s19, 0
      %p86 = por %p84, %p85
      %p87 = scmp.ne.s32.totalorder %s76, %s79
      %p88 = scmp.eq.s32.totalorder %s24, 3
      %p89 = por %p87, %p88
      %p90 = scmp.ne.s32.totalorder %s79, %s80
      %p91 = scmp.eq.s32.totalorder %s24, 0
      %p92 = por %p90, %p91
      %p93 = scmp.ne.s32.totalorder %s79, %s80
      %p94 = scmp.eq.s32.totalorder %s25, 3
      %p95 = por %p93, %p94
      %p97 = scmp.ne.s32.totalorder %s80, %s96
      %p98 = scmp.eq.s32.totalorder %s25, 0
      %p99 = por %p97, %p98
      %s100 = ssub.s32 %s19, %s26
      %p101 = scmp.eq.s32.totalorder %s100, 0
      %s103 = sadd.s32 %s102, 1
      %s104 = scalar_select %p101, %s102, %s103
      %p107 = pneg %p101
      %p108 = scmp.eq.s32.totalorder %s19, 3
      %p109 = por %p107, %p108
      %p110 = scmp.ne.s32.totalorder %s102, %s105
      %p111 = scmp.eq.s32.totalorder %s19, 0
      %p112 = por %p110, %p111
      %p113 = scmp.ne.s32.totalorder %s102, %s105
      %p114 = scmp.eq.s32.totalorder %s24, 3
      %p115 = por %p113, %p114
      %p116 = scmp.ne.s32.totalorder %s105, %s106
      %p117 = scmp.eq.s32.totalorder %s24, 0
      %p118 = por %p116, %p117
      %p119 = scmp.ne.s32.totalorder %s105, %s106
      %p120 = scmp.eq.s32.totalorder %s25, 3
      %p121 = por %p119, %p120
      %p123 = scmp.ne.s32.totalorder %s106, %s122
      %p124 = scmp.eq.s32.totalorder %s25, 0
      %p125 = por %p123, %p124
      %s127 = sadd.s32 %s126, 1
      %p130 = scmp.eq.s32.totalorder %s19, 3
      %p131 = scmp.ne.s32.totalorder %s126, %s128
      %p132 = scmp.eq.s32.totalorder %s19, 0
      %p133 = por %p131, %p132
      %p134 = scmp.ne.s32.totalorder %s126, %s128
      %p135 = scmp.eq.s32.totalorder %s24, 3
      %p136 = por %p134, %p135
      %p137 = scmp.ne.s32.totalorder %s128, %s129
      %p138 = scmp.eq.s32.totalorder %s24, 0
      %p139 = por %p137, %p138
      %p140 = scmp.ne.s32.totalorder %s128, %s129
      %p141 = scmp.eq.s32.totalorder %s25, 3
      %p142 = por %p140, %p141
      %p144 = scmp.ne.s32.totalorder %s129, %s143
      %p145 = scmp.eq.s32.totalorder %s25, 0
      %p146 = por %p144, %p145
      %s148 = sadd.s32 %s147, 1
      %p151 = scmp.eq.s32.totalorder %s19, 3
      %p152 = scmp.ne.s32.totalorder %s147, %s149
      %p153 = scmp.eq.s32.totalorder %s19, 0
      %p154 = por %p152, %p153
      %p155 = scmp.ne.s32.totalorder %s147, %s149
      %p156 = scmp.eq.s32.totalorder %s24, 3
      %p157 = por %p155, %p156
      %p158 = scmp.ne.s32.totalorder %s149, %s150
      %p159 = scmp.eq.s32.totalorder %s24, 0
      %p160 = por %p158, %p159
      %p161 = scmp.ne.s32.totalorder %s149, %s150
      %p162 = scmp.eq.s32.totalorder %s25, 3
      %p163 = por %p161, %p162
      %p165 = scmp.ne.s32.totalorder %s150, %s164
      %p166 = scmp.eq.s32.totalorder %s25, 0
      %p167 = por %p165, %p166
      %s169 = sadd.s32 %s168, 1
      %p172 = scmp.eq.s32.totalorder %s19, 3
      %p173 = scmp.ne.s32.totalorder %s168, %s170
      %p174 = scmp.eq.s32.totalorder %s19, 0
      %p175 = por %p173, %p174
      %p176 = scmp.ne.s32.totalorder %s168, %s170
      %p177 = scmp.eq.s32.totalorder %s24, 3
      %p178 = por %p176, %p177
      %p179 = scmp.ne.s32.totalorder %s170, %s171
      %p180 = scmp.eq.s32.totalorder %s24, 0
      %p181 = por %p179, %p180
      %p182 = scmp.ne.s32.totalorder %s170, %s171
      %p183 = scmp.eq.s32.totalorder %s25, 3
      %p184 = por %p182, %p183
      %p186 = scmp.ne.s32.totalorder %s171, %s185
      %p187 = scmp.eq.s32.totalorder %s25, 0
      %p188 = por %p186, %p187
      %s190 = sadd.s32 %s189, 1
      %p193 = scmp.eq.s32.totalorder %s19, 3
      %p194 = scmp.ne.s32.totalorder %s189, %s191
      %p195 = scmp.eq.s32.totalorder %s19, 0
      %p196 = por %p194, %p195
      %p197 = scmp.ne.s32.totalorder %s189, %s191
      %p198 = scmp.eq.s32.totalorder %s24, 3
      %p199 = por %p197, %p198
      %p200 = scmp.ne.s32.totalorder %s191, %s192
      %p201 = scmp.eq.s32.totalorder %s24, 0
      %p202 = por %p200, %p201
      %p203 = scmp.ne.s32.totalorder %s191, %s192
      %p204 = scmp.eq.s32.totalorder %s25, 3
      %p205 = por %p203, %p204
      %p207 = scmp.ne.s32.totalorder %s192, %s206
      %p208 = scmp.eq.s32.totalorder %s25, 0
      %p209 = por %p207, %p208
      %p210 = scmp.le.s32.totalorder 1, %s19
      %p211 = scmp.lt.s32.totalorder %s19, 5
      %p212 = pnand %p210, %p211
      %p213 = pneg %p212
      // Predicated region
      $region9: #{tpu_custom_call.1} parent=5 // pred_check
        _
      $region10: #{tpu_custom_call.1} parent=5 // pred_check_branch
        %215 = sbr.rel (%p212) target = $region12
      $region11: #{tpu_custom_call.1} parent=5 // pred_region
        %s216 = ssub.s32 %s19, 1
        // Predicated region
        $region13: #{tpu_custom_call.1} parent=11 // pred_check
          %p217 = pneg %p40
        $region14: #{tpu_custom_call.1} parent=11 // pred_check_branch
          %219 = sbr.rel (%p217) target = $region16
        $region15: #{tpu_custom_call.1} parent=11 // pred_region
          %s221 = ssub.s32 192, 192
          %222 = vsyncadd [#allocation4], %s221
          %s224 = sshll.u32 [#allocation3], 4
          %s225 = int_to_ptr.vmem [resolvable:$true] %s224
          %227 = dma.hbm_to_vmem [thread:$0]  %s0, 192, %s225, [#allocation4]
        $region16: #{tpu_custom_call.1} parent=11 // pred_fallthru
          _
        // Predicated region
        $region17: #{tpu_custom_call.1} parent=11 // pred_check
          %p228 = pneg %p139
        $region18: #{tpu_custom_call.1} parent=11 // pred_check_branch
          %230 = sbr.rel (%p228) target = $region20
        $region19: #{tpu_custom_call.1} parent=11 // pred_region
          %s232 = ssub.s32 16, 16
          %233 = vsyncadd [#allocation10], %s232
          %s235 = sshll.u32 [#allocation9], 4
          %s236 = int_to_ptr.vmem [resolvable:$true] %s235
          %238 = dma.hbm_to_vmem [thread:$0]  %s4, 16, %s236, [#allocation10]
        $region20: #{tpu_custom_call.1} parent=11 // pred_fallthru
          _
        // Predicated region
        $region21: #{tpu_custom_call.1} parent=11 // pred_check
          %p239 = pneg %p160
        $region22: #{tpu_custom_call.1} parent=11 // pred_check_branch
          %241 = sbr.rel (%p239) target = $region24
        $region23: #{tpu_custom_call.1} parent=11 // pred_region
          _
        $region24: #{tpu_custom_call.1} parent=11 // pred_fallthru
          _
        // Predicated region
        $region25: #{tpu_custom_call.1} parent=11 // pred_check
          %p242 = pneg %p181
        $region26: #{tpu_custom_call.1} parent=11 // pred_check_branch
          %244 = sbr.rel (%p242) target = $region28
        $region27: #{tpu_custom_call.1} parent=11 // pred_region
          %s246 = ssub.s32 16, 16
          %247 = vsyncadd [#allocation10], %s246
          %s249 = sshll.u32 [#allocation11], 4
          %s250 = int_to_ptr.vmem [resolvable:$true] %s249
          %252 = dma.hbm_to_vmem [thread:$0]  %s6, 16, %s250, [#allocation10]
        $region28: #{tpu_custom_call.1} parent=11 // pred_fallthru
          _
      $region12: #{tpu_custom_call.1} parent=5 // pred_fallthru
        _
      %p253 = scmp.lt.s32.totalorder %s19, 4
      // Predicated region
      $region29: #{tpu_custom_call.1} parent=5 // pred_check
        %p254 = pneg %p253
      $region30: #{tpu_custom_call.1} parent=5 // pred_check_branch
        %256 = sbr.rel (%p254) target = $region32
      $region31: #{tpu_custom_call.1} parent=5 // pred_region
        // Predicated region
        $region33: #{tpu_custom_call.1} parent=31 // pred_check
          %p257 = pneg %p60
        $region34: #{tpu_custom_call.1} parent=31 // pred_check_branch
          %259 = sbr.rel (%p257) target = $region36
        $region35: #{tpu_custom_call.1} parent=31 // pred_region
          %s260 = sand.u32 %s19, 1
          %s261 = scalar_lea.sflag [#allocation7], %s260
          %s262 = sand.u32 %s50, 1
          %s263 = smul.addr %s262, 768
          %s264 = scalar_lea.vmem [#allocation6], %s263
          %s265 = smul.u32 2, %s19
          %s267 = ssub.s32 12288, 12288
          %268 = vsyncadd %s261, %s267
          %s269 = smul.addr %s265, 64
          %s270 = scalar_lea.hbm %s1, %s269
          %s271 = sshll.u32 %s264, 4
          %s272 = int_to_ptr.vmem [resolvable:$true] %s271
          %277 = dma.hbm_to_vmem [thread:$0]  %s270, 12288, %s272, %s261, 512, 128, 8
        $region36: #{tpu_custom_call.1} parent=31 // pred_fallthru
          _
        // Predicated region
        $region37: #{tpu_custom_call.1} parent=31 // pred_check
          %p278 = pneg %p86
        $region38: #{tpu_custom_call.1} parent=31 // pred_check_branch
          %280 = sbr.rel (%p278) target = $region40
        $region39: #{tpu_custom_call.1} parent=31 // pred_region
          %s281 = sand.u32 %s19, 1
          %s282 = scalar_lea.sflag [#allocation7], %s281
          %s283 = sand.u32 %s76, 1
          %s284 = smul.addr %s283, 2
          %s285 = scalar_lea.vmem [#allocation8], %s284
          %s286 = smul.u32 2, %s19
          %s288 = ssub.s32 32, 32
          %289 = vsyncadd %s282, %s288
          %s290 = smul.addr %s286, 16
          %s291 = scalar_lea.hbm %s2, %s290
          %s293 = sshll.u32 %s285, 4
          %s294 = int_to_ptr.vmem [resolvable:$true] %s293
          %296 = dma.hbm_to_vmem [thread:$0]  %s291, 32, %s294, %s282
        $region40: #{tpu_custom_call.1} parent=31 // pred_fallthru
          _
        // Predicated region
        $region41: #{tpu_custom_call.1} parent=31 // pred_check
          %p297 = pneg %p112
        $region42: #{tpu_custom_call.1} parent=31 // pred_check_branch
          %299 = sbr.rel (%p297) target = $region44
        $region43: #{tpu_custom_call.1} parent=31 // pred_region
          %s300 = smul.u32 32, %s19
          %p301 = scmp.lt.s32.totalorder %s300, 127
          %s302 = scalar_select %p301, %s300, 127
          %s303 = smul.addr %s302, 8
          %s304 = scalar_lea.vmem %s3, %s303
          %s305 = smul.u32 32, %s19
        $region44: #{tpu_custom_call.1} parent=31 // pred_fallthru
          _
      $region32: #{tpu_custom_call.1} parent=5 // pred_fallthru
        _
      %p306 = scmp.le.s32.totalorder 1, %s19
      %p307 = scmp.lt.s32.totalorder %s19, 5
      %p308 = pnand %p306, %p307
      %p309 = pneg %p308
      // Predicated region
      $region45: #{tpu_custom_call.1} parent=5 // pred_check
        _
      $region46: #{tpu_custom_call.1} parent=5 // pred_check_branch
        %311 = sbr.rel (%p308) target = $region48
      $region47: #{tpu_custom_call.1} parent=5 // pred_region
        %s312 = ssub.s32 %s19, 1
        // Predicated region
        $region49: #{tpu_custom_call.1} parent=47 // pred_check
          %p313 = pneg %p40
        $region50: #{tpu_custom_call.1} parent=47 // pred_check_branch
          %315 = sbr.rel (%p313) target = $region52
        $region51: #{tpu_custom_call.1} parent=47 // pred_region
          %316 = dma.done [#allocation4], 192
        $region52: #{tpu_custom_call.1} parent=47 // pred_fallthru
          _
        %s317 = sand.u32 %s24, 1
        %s318 = scalar_lea.sflag [#allocation7], %s317
        %s319 = sand.u32 %s53, 1
        %s320 = smul.addr %s319, 768
        %s321 = scalar_lea.vmem [#allocation6], %s320
        // Predicated region
        $region53: #{tpu_custom_call.1} parent=47 // pred_check
          %p322 = pneg %p66
        $region54: #{tpu_custom_call.1} parent=47 // pred_check_branch
          %324 = sbr.rel (%p322) target = $region56
        $region55: #{tpu_custom_call.1} parent=47 // pred_region
          %325 = dma.done %s318, 12288
        $region56: #{tpu_custom_call.1} parent=47 // pred_fallthru
          _
        %s326 = sand.u32 %s24, 1
        %s327 = scalar_lea.sflag [#allocation7], %s326
        %s328 = sand.u32 %s79, 1
        %s329 = smul.addr %s328, 2
        %s330 = scalar_lea.vmem [#allocation8], %s329
        // Predicated region
        $region57: #{tpu_custom_call.1} parent=47 // pred_check
          %p331 = pneg %p92
        $region58: #{tpu_custom_call.1} parent=47 // pred_check_branch
          %333 = sbr.rel (%p331) target = $region60
        $region59: #{tpu_custom_call.1} parent=47 // pred_region
          %334 = dma.done %s327, 32
        $region60: #{tpu_custom_call.1} parent=47 // pred_fallthru
          _
        // Predicated region
        $region61: #{tpu_custom_call.1} parent=47 // pred_check
          %p335 = pneg %p139
        $region62: #{tpu_custom_call.1} parent=47 // pred_check_branch
          %337 = sbr.rel (%p335) target = $region64
        $region63: #{tpu_custom_call.1} parent=47 // pred_region
          %338 = dma.done [#allocation10], 16
        $region64: #{tpu_custom_call.1} parent=47 // pred_fallthru
          _
        // Predicated region
        $region65: #{tpu_custom_call.1} parent=47 // pred_check
          %p339 = pneg %p181
        $region66: #{tpu_custom_call.1} parent=47 // pred_check_branch
          %341 = sbr.rel (%p339) target = $region68
        $region67: #{tpu_custom_call.1} parent=47 // pred_region
          %342 = dma.done [#allocation10], 16
        $region68: #{tpu_custom_call.1} parent=47 // pred_fallthru
          _
        %p343 = pneg %p40
        %p344 = pneg %p37
        %s345 = sand.u32 %s24, 1
        %s346 = scalar_lea.sflag [#allocation7], %s345
        %s347 = sand.u32 %s53, 1
        %s348 = smul.addr %s347, 768
        %s349 = scalar_lea.vmem [#allocation6], %s348
        %p350 = pneg %p66
        %p351 = pneg %p63
        %s352 = sand.u32 %s24, 1
        %s353 = scalar_lea.sflag [#allocation7], %s352
        %s354 = sand.u32 %s79, 1
        %s355 = smul.addr %s354, 2
        %s356 = scalar_lea.vmem [#allocation8], %s355
        %p357 = pneg %p92
        %p358 = pneg %p89
        %s359 = smul.u32 32, %s24
        %p360 = scmp.lt.s32.totalorder %s359, 127
        %s361 = scalar_select %p360, %s359, 127
        %s362 = smul.addr %s361, 8
        %s363 = scalar_lea.vmem %s3, %s362
        %p364 = pneg %p118
        %p365 = pneg %p115
        %p366 = pneg %p139
        %p367 = pneg %p136
        %p368 = pneg %p160
        %p369 = pneg %p157
        %p370 = pneg %p181
        %p371 = pneg %p178
        %p372 = pneg %p202
        %p373 = pneg %p199
        %s374 = smul.u32 2, %s24
        %s375 = smul.u32 2, %s24
        %s376 = smul.u32 32, %s24
        %p377 = scmp.lt.s32.totalorder %s376, 127
        %s378 = scalar_select %p377, %s376, 127
        %s379 = smul.addr %s378, 8
        %s380 = scalar_lea.vmem %s3, %s379
        %s381 = smul.u32 32, %s24
        %p382 = scmp.eq.s32.totalorder %s24, 0
        // Predicated region
        $region69: #{tpu_custom_call.1} parent=47 // pred_check
          %p383 = pneg %p382
        $region70: #{tpu_custom_call.1} parent=47 // pred_check_branch
          %385 = sbr.rel (%p383) target = $region72
        $region71: #{tpu_custom_call.1} parent=47 // pred_region
          %vm386 = vcmask 156672
          %387 = vst.msk [vmem:[#allocation2] sm:$0x3] %vm386, 0.0
        $region72: #{tpu_custom_call.1} parent=47 // pred_fallthru
          _
        %v388 = vld [vmem:[#allocation3] sm:$0xff]
        %v389 = vld [vmem:[#allocation3 + $0x8] sm:$0xf]
        %v392 = vcombine.high %v388, %v388
        %v394 = vunpack.c.l.s4 1983009808
        %v395 = vunpack.c.0.s8 %v394
        %v396 = vlaneseq
        %v397 = vshrl.u32 %v396, 7
        %v398 = vsub.s32 %v395, %v397
        %v399 = vrot.slane %v388, %v398
        %v401 = vunpack.c.l.s4 1983009808
        %v402 = vunpack.c.0.s8 %v401
        %v403 = vlaneseq
        %v404 = vshrl.u32 %v403, 7
        %v405 = vsub.s32 %v402, %v404
        %v406 = vrot.slane %v392, %v405
        %v407 = vcombine.high %v399, %v399
        %v408 = vcombine.high %v406, %v406
        %v410 = vunpack.c.l.s4 1983009808
        %v411 = vunpack.c.0.s8 %v410
        %v412 = vlaneseq
        %v413 = vshrl.u32 %v412, 7
        %v414 = vsub.s32 %v411, %v413
        %v415 = vrot.slane %v389, %v414
        %v416 = vcombine.high %v415, %v415
        %v423 = vpack.c.bf16 %v399, %v399
        %v424 = vpack.c.bf16 %v407, %v407
        %v425 = vpack.c.bf16 %v406, %v406
        %v426 = vpack.c.bf16 %v408, %v408
        %v427 = vpack.c.bf16 %v415, %v415
        %v428 = vpack.c.bf16 %v416, %v416
        %v429 = vld [vmem:[%s321] sm:$0xff]
        %v430 = vld [vmem:[%s321 + $0x8] sm:$0xff]
        %v431 = vld [vmem:[%s321 + $0x10] sm:$0xff]
        %v432 = vld [vmem:[%s321 + $0x18] sm:$0xff]
        %v433 = vld [vmem:[%s321 + $0x20] sm:$0xff]
        %v434 = vld [vmem:[%s321 + $0x28] sm:$0xff]
        %v435 = vld [vmem:[%s321 + $0x30] sm:$0xff]
        %v436 = vld [vmem:[%s321 + $0x38] sm:$0xff]
        %v437 = vld [vmem:[%s321 + $0x40] sm:$0xff]
        %v438 = vld [vmem:[%s321 + $0x48] sm:$0xff]
        %v439 = vld [vmem:[%s321 + $0x50] sm:$0xff]
        %v440 = vld [vmem:[%s321 + $0x58] sm:$0xff]
        %v441 = vld [vmem:[%s321 + $0x60] sm:$0xff]
        %v442 = vld [vmem:[%s321 + $0x68] sm:$0xff]
        %v443 = vld [vmem:[%s321 + $0x70] sm:$0xff]
        %v444 = vld [vmem:[%s321 + $0x78] sm:$0xff]
        %v445 = vld [vmem:[%s321 + $0x80] sm:$0xff]
        %v446 = vld [vmem:[%s321 + $0x88] sm:$0xff]
        %v447 = vld [vmem:[%s321 + $0x90] sm:$0xff]
        %v448 = vld [vmem:[%s321 + $0x98] sm:$0xff]
        %v449 = vld [vmem:[%s321 + $0xa0] sm:$0xff]
        %v450 = vld [vmem:[%s321 + $0xa8] sm:$0xff]
        %v451 = vld [vmem:[%s321 + $0xb0] sm:$0xff]
        %v452 = vld [vmem:[%s321 + $0xb8] sm:$0xff]
        %v453 = vld [vmem:[%s321 + $0xc0] sm:$0xff]
        %v454 = vld [vmem:[%s321 + $0xc8] sm:$0xff]
        %v455 = vld [vmem:[%s321 + $0xd0] sm:$0xff]
        %v456 = vld [vmem:[%s321 + $0xd8] sm:$0xff]
        %v457 = vld [vmem:[%s321 + $0xe0] sm:$0xff]
        %v458 = vld [vmem:[%s321 + $0xe8] sm:$0xff]
        %v459 = vld [vmem:[%s321 + $0xf0] sm:$0xff]
        %v460 = vld [vmem:[%s321 + $0xf8] sm:$0xff]
        %v461 = vld [vmem:[%s321 + $0x100] sm:$0xff]
        %v462 = vld [vmem:[%s321 + $0x108] sm:$0xff]
        %v463 = vld [vmem:[%s321 + $0x110] sm:$0xff]
        %v464 = vld [vmem:[%s321 + $0x118] sm:$0xff]
        %v465 = vld [vmem:[%s321 + $0x120] sm:$0xff]
        %v466 = vld [vmem:[%s321 + $0x128] sm:$0xff]
        %v467 = vld [vmem:[%s321 + $0x130] sm:$0xff]
        %v468 = vld [vmem:[%s321 + $0x138] sm:$0xff]
        %v469 = vld [vmem:[%s321 + $0x140] sm:$0xff]
        %v470 = vld [vmem:[%s321 + $0x148] sm:$0xff]
        %v471 = vld [vmem:[%s321 + $0x150] sm:$0xff]
        %v472 = vld [vmem:[%s321 + $0x158] sm:$0xff]
        %v473 = vld [vmem:[%s321 + $0x160] sm:$0xff]
        %v474 = vld [vmem:[%s321 + $0x168] sm:$0xff]
        %v475 = vld [vmem:[%s321 + $0x170] sm:$0xff]
        %v476 = vld [vmem:[%s321 + $0x178] sm:$0xff]
        %v477 = vld [vmem:[%s321 + $0x180] sm:$0xff]
        %v478 = vld [vmem:[%s321 + $0x188] sm:$0xff]
        %v479 = vld [vmem:[%s321 + $0x190] sm:$0xff]
        %v480 = vld [vmem:[%s321 + $0x198] sm:$0xff]
        %v481 = vld [vmem:[%s321 + $0x1a0] sm:$0xff]
        %v482 = vld [vmem:[%s321 + $0x1a8] sm:$0xff]
        %v483 = vld [vmem:[%s321 + $0x1b0] sm:$0xff]
        %v484 = vld [vmem:[%s321 + $0x1b8] sm:$0xff]
        %v485 = vld [vmem:[%s321 + $0x1c0] sm:$0xff]
        %v486 = vld [vmem:[%s321 + $0x1c8] sm:$0xff]
        %v487 = vld [vmem:[%s321 + $0x1d0] sm:$0xff]
        %v488 = vld [vmem:[%s321 + $0x1d8] sm:$0xff]
        %v489 = vld [vmem:[%s321 + $0x1e0] sm:$0xff]
        %v490 = vld [vmem:[%s321 + $0x1e8] sm:$0xff]
        %v491 = vld [vmem:[%s321 + $0x1f0] sm:$0xff]
        %v492 = vld [vmem:[%s321 + $0x1f8] sm:$0xff]
        %v493 = vld [vmem:[%s321 + $0x200] sm:$0xff]
        %v494 = vld [vmem:[%s321 + $0x208] sm:$0xff]
        %v495 = vld [vmem:[%s321 + $0x210] sm:$0xff]
        %v496 = vld [vmem:[%s321 + $0x218] sm:$0xff]
        %v497 = vld [vmem:[%s321 + $0x220] sm:$0xff]
        %v498 = vld [vmem:[%s321 + $0x228] sm:$0xff]
        %v499 = vld [vmem:[%s321 + $0x230] sm:$0xff]
        %v500 = vld [vmem:[%s321 + $0x238] sm:$0xff]
        %v501 = vld [vmem:[%s321 + $0x240] sm:$0xff]
        %v502 = vld [vmem:[%s321 + $0x248] sm:$0xff]
        %v503 = vld [vmem:[%s321 + $0x250] sm:$0xff]
        %v504 = vld [vmem:[%s321 + $0x258] sm:$0xff]
        %v505 = vld [vmem:[%s321 + $0x260] sm:$0xff]
        %v506 = vld [vmem:[%s321 + $0x268] sm:$0xff]
        %v507 = vld [vmem:[%s321 + $0x270] sm:$0xff]
        %v508 = vld [vmem:[%s321 + $0x278] sm:$0xff]
        %v509 = vld [vmem:[%s321 + $0x280] sm:$0xff]
        %v510 = vld [vmem:[%s321 + $0x288] sm:$0xff]
        %v511 = vld [vmem:[%s321 + $0x290] sm:$0xff]
        %v512 = vld [vmem:[%s321 + $0x298] sm:$0xff]
        %v513 = vld [vmem:[%s321 + $0x2a0] sm:$0xff]
        %v514 = vld [vmem:[%s321 + $0x2a8] sm:$0xff]
        %v515 = vld [vmem:[%s321 + $0x2b0] sm:$0xff]
        %v516 = vld [vmem:[%s321 + $0x2b8] sm:$0xff]
        %v517 = vld [vmem:[%s321 + $0x2c0] sm:$0xff]
        %v518 = vld [vmem:[%s321 + $0x2c8] sm:$0xff]
        %v519 = vld [vmem:[%s321 + $0x2d0] sm:$0xff]
        %v520 = vld [vmem:[%s321 + $0x2d8] sm:$0xff]
        %v521 = vld [vmem:[%s321 + $0x2e0] sm:$0xff]
        %v522 = vld [vmem:[%s321 + $0x2e8] sm:$0xff]
        %v523 = vld [vmem:[%s321 + $0x2f0] sm:$0xff]
        %v524 = vld [vmem:[%s321 + $0x2f8] sm:$0xff]
        %v525 = vld [vmem:[%s330] sm:$0x3]
        %v527 = vlaneseq
        %v528 = vshrl.u32 %v527, 7
        %v529 = vsub.s32 0, %v528
        %v530 = vrot.slane %v525, %v529
        %v531 = vlaneseq
        %v532 = vshrl.u32 %v531, 7
        %v533 = vsub.s32 1, %v532
        %v534 = vrot.slane %v525, %v533
        %v633 = vunpack.c.l.b16 %v429
        %v634 = vunpack.c.h.b16 %v429
        %v635 = vunpack.c.l.b16 %v430
        %v636 = vunpack.c.h.b16 %v430
        %v637 = vunpack.c.l.b16 %v431
        %v638 = vunpack.c.h.b16 %v431
        %v639 = vunpack.c.l.b16 %v432
        %v640 = vunpack.c.h.b16 %v432
        %v641 = vunpack.c.l.b16 %v433
        %v642 = vunpack.c.h.b16 %v433
        %v643 = vunpack.c.l.b16 %v434
        %v644 = vunpack.c.h.b16 %v434
        %v645 = vunpack.c.l.b16 %v435
        %v646 = vunpack.c.h.b16 %v435
        %v647 = vunpack.c.l.b16 %v436
        %v648 = vunpack.c.h.b16 %v436
        %v649 = vunpack.c.l.b16 %v437
        %v650 = vunpack.c.h.b16 %v437
        %v651 = vunpack.c.l.b16 %v438
        %v652 = vunpack.c.h.b16 %v438
        %v653 = vunpack.c.l.b16 %v439
        %v654 = vunpack.c.h.b16 %v439
        %v655 = vunpack.c.l.b16 %v440
        %v656 = vunpack.c.h.b16 %v440
        %v657 = vunpack.c.l.b16 %v441
        %v658 = vunpack.c.h.b16 %v441
        %v659 = vunpack.c.l.b16 %v442
        %v660 = vunpack.c.h.b16 %v442
        %v661 = vunpack.c.l.b16 %v443
        %v662 = vunpack.c.h.b16 %v443
        %v663 = vunpack.c.l.b16 %v444
        %v664 = vunpack.c.h.b16 %v444
        %v665 = vunpack.c.l.b16 %v445
        %v666 = vunpack.c.h.b16 %v445
        %v667 = vunpack.c.l.b16 %v446
        %v668 = vunpack.c.h.b16 %v446
        %v669 = vunpack.c.l.b16 %v447
        %v670 = vunpack.c.h.b16 %v447
        %v671 = vunpack.c.l.b16 %v448
        %v672 = vunpack.c.h.b16 %v448
        %v673 = vunpack.c.l.b16 %v449
        %v674 = vunpack.c.h.b16 %v449
        %v675 = vunpack.c.l.b16 %v450
        %v676 = vunpack.c.h.b16 %v450
        %v677 = vunpack.c.l.b16 %v451
        %v678 = vunpack.c.h.b16 %v451
        %v679 = vunpack.c.l.b16 %v452
        %v680 = vunpack.c.h.b16 %v452
        %v681 = vunpack.c.l.b16 %v453
        %v682 = vunpack.c.h.b16 %v453
        %v683 = vunpack.c.l.b16 %v454
        %v684 = vunpack.c.h.b16 %v454
        %v685 = vunpack.c.l.b16 %v455
        %v686 = vunpack.c.h.b16 %v455
        %v687 = vunpack.c.l.b16 %v456
        %v688 = vunpack.c.h.b16 %v456
        %v689 = vunpack.c.l.b16 %v457
        %v690 = vunpack.c.h.b16 %v457
        %v691 = vunpack.c.l.b16 %v458
        %v692 = vunpack.c.h.b16 %v458
        %v693 = vunpack.c.l.b16 %v459
        %v694 = vunpack.c.h.b16 %v459
        %v695 = vunpack.c.l.b16 %v460
        %v696 = vunpack.c.h.b16 %v460
        %v697 = vunpack.c.l.b16 %v461
        %v698 = vunpack.c.h.b16 %v461
        %v699 = vunpack.c.l.b16 %v462
        %v700 = vunpack.c.h.b16 %v462
        %v701 = vunpack.c.l.b16 %v463
        %v702 = vunpack.c.h.b16 %v463
        %v703 = vunpack.c.l.b16 %v464
        %v704 = vunpack.c.h.b16 %v464
        %v705 = vunpack.c.l.b16 %v465
        %v706 = vunpack.c.h.b16 %v465
        %v707 = vunpack.c.l.b16 %v466
        %v708 = vunpack.c.h.b16 %v466
        %v709 = vunpack.c.l.b16 %v467
        %v710 = vunpack.c.h.b16 %v467
        %v711 = vunpack.c.l.b16 %v468
        %v712 = vunpack.c.h.b16 %v468
        %v713 = vunpack.c.l.b16 %v469
        %v714 = vunpack.c.h.b16 %v469
        %v715 = vunpack.c.l.b16 %v470
        %v716 = vunpack.c.h.b16 %v470
        %v717 = vunpack.c.l.b16 %v471
        %v718 = vunpack.c.h.b16 %v471
        %v719 = vunpack.c.l.b16 %v472
        %v720 = vunpack.c.h.b16 %v472
        %v721 = vunpack.c.l.b16 %v473
        %v722 = vunpack.c.h.b16 %v473
        %v723 = vunpack.c.l.b16 %v474
        %v724 = vunpack.c.h.b16 %v474
        %v725 = vunpack.c.l.b16 %v475
        %v726 = vunpack.c.h.b16 %v475
        %v727 = vunpack.c.l.b16 %v476
        %v728 = vunpack.c.h.b16 %v476
        %v729 = vunpack.c.l.b16 %v477
        %v730 = vunpack.c.h.b16 %v477
        %v731 = vunpack.c.l.b16 %v478
        %v732 = vunpack.c.h.b16 %v478
        %v733 = vunpack.c.l.b16 %v479
        %v734 = vunpack.c.h.b16 %v479
        %v735 = vunpack.c.l.b16 %v480
        %v736 = vunpack.c.h.b16 %v480
        %v737 = vunpack.c.l.b16 %v481
        %v738 = vunpack.c.h.b16 %v481
        %v739 = vunpack.c.l.b16 %v482
        %v740 = vunpack.c.h.b16 %v482
        %v741 = vunpack.c.l.b16 %v483
        %v742 = vunpack.c.h.b16 %v483
        %v743 = vunpack.c.l.b16 %v484
        %v744 = vunpack.c.h.b16 %v484
        %v745 = vunpack.c.l.b16 %v485
        %v746 = vunpack.c.h.b16 %v485
        %v747 = vunpack.c.l.b16 %v486
        %v748 = vunpack.c.h.b16 %v486
        %v749 = vunpack.c.l.b16 %v487
        %v750 = vunpack.c.h.b16 %v487
        %v751 = vunpack.c.l.b16 %v488
        %v752 = vunpack.c.h.b16 %v488
        %v753 = vunpack.c.l.b16 %v489
        %v754 = vunpack.c.h.b16 %v489
        %v755 = vunpack.c.l.b16 %v490
        %v756 = vunpack.c.h.b16 %v490
        %v757 = vunpack.c.l.b16 %v491
        %v758 = vunpack.c.h.b16 %v491
        %v759 = vunpack.c.l.b16 %v492
        %v760 = vunpack.c.h.b16 %v492
        %v761 = vunpack.c.l.b16 %v493
        %v762 = vunpack.c.h.b16 %v493
        %v763 = vunpack.c.l.b16 %v494
        %v764 = vunpack.c.h.b16 %v494
        %v765 = vunpack.c.l.b16 %v495
        %v766 = vunpack.c.h.b16 %v495
        %v767 = vunpack.c.l.b16 %v496
        %v768 = vunpack.c.h.b16 %v496
        %v769 = vunpack.c.l.b16 %v497
        %v770 = vunpack.c.h.b16 %v497
        %v771 = vunpack.c.l.b16 %v498
        %v772 = vunpack.c.h.b16 %v498
        %v773 = vunpack.c.l.b16 %v499
        %v774 = vunpack.c.h.b16 %v499
        %v775 = vunpack.c.l.b16 %v500
        %v776 = vunpack.c.h.b16 %v500
        %v777 = vunpack.c.l.b16 %v501
        %v778 = vunpack.c.h.b16 %v501
        %v779 = vunpack.c.l.b16 %v502
        %v780 = vunpack.c.h.b16 %v502
        %v781 = vunpack.c.l.b16 %v503
        %v782 = vunpack.c.h.b16 %v503
        %v783 = vunpack.c.l.b16 %v504
        %v784 = vunpack.c.h.b16 %v504
        %v785 = vunpack.c.l.b16 %v505
        %v786 = vunpack.c.h.b16 %v505
        %v787 = vunpack.c.l.b16 %v506
        %v788 = vunpack.c.h.b16 %v506
        %v789 = vunpack.c.l.b16 %v507
        %v790 = vunpack.c.h.b16 %v507
        %v791 = vunpack.c.l.b16 %v508
        %v792 = vunpack.c.h.b16 %v508
        %v793 = vunpack.c.l.b16 %v509
        %v794 = vunpack.c.h.b16 %v509
        %v795 = vunpack.c.l.b16 %v510
        %v796 = vunpack.c.h.b16 %v510
        %v797 = vunpack.c.l.b16 %v511
        %v798 = vunpack.c.h.b16 %v511
        %v799 = vunpack.c.l.b16 %v512
        %v800 = vunpack.c.h.b16 %v512
        %v801 = vunpack.c.l.b16 %v513
        %v802 = vunpack.c.h.b16 %v513
        %v803 = vunpack.c.l.b16 %v514
        %v804 = vunpack.c.h.b16 %v514
        %v805 = vunpack.c.l.b16 %v515
        %v806 = vunpack.c.h.b16 %v515
        %v807 = vunpack.c.l.b16 %v516
        %v808 = vunpack.c.h.b16 %v516
        %v809 = vunpack.c.l.b16 %v517
        %v810 = vunpack.c.h.b16 %v517
        %v811 = vunpack.c.l.b16 %v518
        %v812 = vunpack.c.h.b16 %v518
        %v813 = vunpack.c.l.b16 %v519
        %v814 = vunpack.c.h.b16 %v519
        %v815 = vunpack.c.l.b16 %v520
        %v816 = vunpack.c.h.b16 %v520
        %v817 = vunpack.c.l.b16 %v521
        %v818 = vunpack.c.h.b16 %v521
        %v819 = vunpack.c.l.b16 %v522
        %v820 = vunpack.c.h.b16 %v522
        %v821 = vunpack.c.l.b16 %v523
        %v822 = vunpack.c.h.b16 %v523
        %v823 = vunpack.c.l.b16 %v524
        %v824 = vunpack.c.h.b16 %v524
        %v825 = vpack.c.b16 %v635, %v633
        %v826 = vpack.c.b16 %v636, %v634
        %v827 = vpack.c.b16 %v639, %v637
        %v828 = vpack.c.b16 %v640, %v638
        %v829 = vpack.c.b16 %v643, %v641
        %v830 = vpack.c.b16 %v644, %v642
        %v831 = vpack.c.b16 %v647, %v645
        %v832 = vpack.c.b16 %v648, %v646
        %v833 = vpack.c.b16 %v651, %v649
        %v834 = vpack.c.b16 %v652, %v650
        %v835 = vpack.c.b16 %v655, %v653
        %v836 = vpack.c.b16 %v656, %v654
        %v837 = vpack.c.b16 %v659, %v657
        %v838 = vpack.c.b16 %v660, %v658
        %v839 = vpack.c.b16 %v663, %v661
        %v840 = vpack.c.b16 %v664, %v662
        %v841 = vpack.c.b16 %v667, %v665
        %v842 = vpack.c.b16 %v668, %v666
        %v843 = vpack.c.b16 %v671, %v669
        %v844 = vpack.c.b16 %v672, %v670
        %v845 = vpack.c.b16 %v675, %v673
        %v846 = vpack.c.b16 %v676, %v674
        %v847 = vpack.c.b16 %v679, %v677
        %v848 = vpack.c.b16 %v680, %v678
        %v849 = vpack.c.b16 %v683, %v681
        %v850 = vpack.c.b16 %v684, %v682
        %v851 = vpack.c.b16 %v687, %v685
        %v852 = vpack.c.b16 %v688, %v686
        %v853 = vpack.c.b16 %v691, %v689
        %v854 = vpack.c.b16 %v692, %v690
        %v855 = vpack.c.b16 %v695, %v693
        %v856 = vpack.c.b16 %v696, %v694
        %v857 = vpack.c.b16 %v699, %v697
        %v858 = vpack.c.b16 %v700, %v698
        %v859 = vpack.c.b16 %v703, %v701
        %v860 = vpack.c.b16 %v704, %v702
        %v861 = vpack.c.b16 %v707, %v705
        %v862 = vpack.c.b16 %v708, %v706
        %v863 = vpack.c.b16 %v711, %v709
        %v864 = vpack.c.b16 %v712, %v710
        %v865 = vpack.c.b16 %v715, %v713
        %v866 = vpack.c.b16 %v716, %v714
        %v867 = vpack.c.b16 %v719, %v717
        %v868 = vpack.c.b16 %v720, %v718
        %v869 = vpack.c.b16 %v723, %v721
        %v870 = vpack.c.b16 %v724, %v722
        %v871 = vpack.c.b16 %v727, %v725
        %v872 = vpack.c.b16 %v728, %v726
        %v873 = vpack.c.b16 %v731, %v729
        %v874 = vpack.c.b16 %v732, %v730
        %v875 = vpack.c.b16 %v735, %v733
        %v876 = vpack.c.b16 %v736, %v734
        %v877 = vpack.c.b16 %v739, %v737
        %v878 = vpack.c.b16 %v740, %v738
        %v879 = vpack.c.b16 %v743, %v741
        %v880 = vpack.c.b16 %v744, %v742
        %v881 = vpack.c.b16 %v747, %v745
        %v882 = vpack.c.b16 %v748, %v746
        %v883 = vpack.c.b16 %v751, %v749
        %v884 = vpack.c.b16 %v752, %v750
        %v885 = vpack.c.b16 %v755, %v753
        %v886 = vpack.c.b16 %v756, %v754
        %v887 = vpack.c.b16 %v759, %v757
        %v888 = vpack.c.b16 %v760, %v758
        %v889 = vpack.c.b16 %v763, %v761
        %v890 = vpack.c.b16 %v764, %v762
        %v891 = vpack.c.b16 %v767, %v765
        %v892 = vpack.c.b16 %v768, %v766
        %v893 = vpack.c.b16 %v771, %v769
        %v894 = vpack.c.b16 %v772, %v770
        %v895 = vpack.c.b16 %v775, %v773
        %v896 = vpack.c.b16 %v776, %v774
        %v897 = vpack.c.b16 %v779, %v777
        %v898 = vpack.c.b16 %v780, %v778
        %v899 = vpack.c.b16 %v783, %v781
        %v900 = vpack.c.b16 %v784, %v782
        %v901 = vpack.c.b16 %v787, %v785
        %v902 = vpack.c.b16 %v788, %v786
        %v903 = vpack.c.b16 %v791, %v789
        %v904 = vpack.c.b16 %v792, %v790
        %v905 = vpack.c.b16 %v795, %v793
        %v906 = vpack.c.b16 %v796, %v794
        %v907 = vpack.c.b16 %v799, %v797
        %v908 = vpack.c.b16 %v800, %v798
        %v909 = vpack.c.b16 %v803, %v801
        %v910 = vpack.c.b16 %v804, %v802
        %v911 = vpack.c.b16 %v807, %v805
        %v912 = vpack.c.b16 %v808, %v806
        %v913 = vpack.c.b16 %v811, %v809
        %v914 = vpack.c.b16 %v812, %v810
        %v915 = vpack.c.b16 %v815, %v813
        %v916 = vpack.c.b16 %v816, %v814
        %v917 = vpack.c.b16 %v819, %v817
        %v918 = vpack.c.b16 %v820, %v818
        %v919 = vpack.c.b16 %v823, %v821
        %v920 = vpack.c.b16 %v824, %v822
        %1017 = vmatprep.subr.bf16.mxu0 %v826
        %1018 = vmatpush1.bf16.msra.mxu0 %v825
        %1019 = vmatprep.subr.bf16.mxu0 %v828
        %1020 = vmatpush1.bf16.msra.mxu0 %v827
        %1021 = vmatprep.subr.bf16.mxu0 %v830
        %1022 = vmatpush1.bf16.msra.mxu0 %v829
        %1023 = vmatprep.subr.bf16.mxu0 %v832
        %1024 = vmatpush1.bf16.msra.mxu0 %v831
        %1025 = vmatprep.subr.bf16.mxu0 %v834
        %1026 = vmatpush1.bf16.msra.mxu0 %v833
        %1027 = vmatprep.subr.bf16.mxu0 %v836
        %1028 = vmatpush1.bf16.msra.mxu0 %v835
        %1029 = vmatprep.subr.bf16.mxu0 %v838
        %1030 = vmatpush1.bf16.msra.mxu0 %v837
        %1031 = vmatprep.subr.bf16.mxu0 %v840
        %1032 = vmatpush1.bf16.msra.mxu0 %v839
        %1033 = vmatprep.subr.bf16.mxu0 %v842
        %1034 = vmatpush1.bf16.msra.mxu0 %v841
        %1035 = vmatprep.subr.bf16.mxu0 %v844
        %1036 = vmatpush1.bf16.msra.mxu0 %v843
        %1037 = vmatprep.subr.bf16.mxu0 %v846
        %1038 = vmatpush1.bf16.msra.mxu0 %v845
        %1039 = vmatprep.subr.bf16.mxu0 %v848
        %1040 = vmatpush1.bf16.msra.mxu0 %v847
        %1041 = vmatprep.subr.bf16.mxu0 %v850
        %1042 = vmatpush1.bf16.msra.mxu0 %v849
        %1043 = vmatprep.subr.bf16.mxu0 %v852
        %1044 = vmatpush1.bf16.msra.mxu0 %v851
        %1045 = vmatprep.subr.bf16.mxu0 %v854
        %1046 = vmatpush1.bf16.msra.mxu0 %v853
        %1047 = vmatprep.subr.bf16.mxu0 %v856
        %1048 = vmatpush1.bf16.msra.mxu0 %v855
        %1049 = vmatprep.mubr.bf16.mxu0 %v424
        %1050 = vmatmul.mubr.bf16.gmra.mrb[0].mxu0 %v423
        %v1051 = vpop.f32.mrb[0].mxu0
        %v1052 = vadd.f32 %v530, %v1051
        %v1053 = vpop.f32.mrb[0].mxu0
        %v1054 = vadd.f32 %v534, %v1053
        %v1055 = vpop.f32.mrb[0].mxu0
        %v1056 = vpop.f32.mrb[0].mxu0
        %1057 = vdwg.mxu0
        %1058 = vmatprep.subr.bf16.mxu0 %v858
        %1059 = vmatpush1.bf16.msra.mxu0 %v857
        %1060 = vmatprep.subr.bf16.mxu0 %v860
        %1061 = vmatpush1.bf16.msra.mxu0 %v859
        %1062 = vmatprep.subr.bf16.mxu0 %v862
        %1063 = vmatpush1.bf16.msra.mxu0 %v861
        %1064 = vmatprep.subr.bf16.mxu0 %v864
        %1065 = vmatpush1.bf16.msra.mxu0 %v863
        %1066 = vmatprep.subr.bf16.mxu0 %v866
        %1067 = vmatpush1.bf16.msra.mxu0 %v865
        %1068 = vmatprep.subr.bf16.mxu0 %v868
        %1069 = vmatpush1.bf16.msra.mxu0 %v867
        %1070 = vmatprep.subr.bf16.mxu0 %v870
        %1071 = vmatpush1.bf16.msra.mxu0 %v869
        %1072 = vmatprep.subr.bf16.mxu0 %v872
        %1073 = vmatpush1.bf16.msra.mxu0 %v871
        %1074 = vmatprep.subr.bf16.mxu0 %v874
        %1075 = vmatpush1.bf16.msra.mxu0 %v873
        %1076 = vmatprep.subr.bf16.mxu0 %v876
        %1077 = vmatpush1.bf16.msra.mxu0 %v875
        %1078 = vmatprep.subr.bf16.mxu0 %v878
        %1079 = vmatpush1.bf16.msra.mxu0 %v877
        %1080 = vmatprep.subr.bf16.mxu0 %v880
        %1081 = vmatpush1.bf16.msra.mxu0 %v879
        %1082 = vmatprep.subr.bf16.mxu0 %v882
        %1083 = vmatpush1.bf16.msra.mxu0 %v881
        %1084 = vmatprep.subr.bf16.mxu0 %v884
        %1085 = vmatpush1.bf16.msra.mxu0 %v883
        %1086 = vmatprep.subr.bf16.mxu0 %v886
        %1087 = vmatpush1.bf16.msra.mxu0 %v885
        %1088 = vmatprep.subr.bf16.mxu0 %v888
        %1089 = vmatpush1.bf16.msra.mxu0 %v887
        %1090 = vmatprep.mubr.bf16.mxu0 %v426
        %1091 = vmatmul.mubr.bf16.gmra.mrb[0].mxu0 %v425
        %v1092 = vpop.f32.mrb[0].mxu0
        %v1093 = vadd.f32 %v1052, %v1092
        %v1094 = vpop.f32.mrb[0].mxu0
        %v1095 = vadd.f32 %v1054, %v1094
        %v1096 = vpop.f32.mrb[0].mxu0
        %v1097 = vpop.f32.mrb[0].mxu0
        %1098 = vdwg.mxu0
        %1099 = vmatprep.subr.bf16.mxu0 %v890
        %1100 = vmatpush1.bf16.msra.mxu0 %v889
        %1101 = vmatprep.subr.bf16.mxu0 %v892
        %1102 = vmatpush1.bf16.msra.mxu0 %v891
        %1103 = vmatprep.subr.bf16.mxu0 %v894
        %1104 = vmatpush1.bf16.msra.mxu0 %v893
        %1105 = vmatprep.subr.bf16.mxu0 %v896
        %1106 = vmatpush1.bf16.msra.mxu0 %v895
        %1107 = vmatprep.subr.bf16.mxu0 %v898
        %1108 = vmatpush1.bf16.msra.mxu0 %v897
        %1109 = vmatprep.subr.bf16.mxu0 %v900
        %1110 = vmatpush1.bf16.msra.mxu0 %v899
        %1111 = vmatprep.subr.bf16.mxu0 %v902
        %1112 = vmatpush1.bf16.msra.mxu0 %v901
        %1113 = vmatprep.subr.bf16.mxu0 %v904
        %1114 = vmatpush1.bf16.msra.mxu0 %v903
        %1115 = vmatprep.subr.bf16.mxu0 %v906
        %1116 = vmatpush1.bf16.msra.mxu0 %v905
        %1117 = vmatprep.subr.bf16.mxu0 %v908
        %1118 = vmatpush1.bf16.msra.mxu0 %v907
        %1119 = vmatprep.subr.bf16.mxu0 %v910
        %1120 = vmatpush1.bf16.msra.mxu0 %v909
        %1121 = vmatprep.subr.bf16.mxu0 %v912
        %1122 = vmatpush1.bf16.msra.mxu0 %v911
        %1123 = vmatprep.subr.bf16.mxu0 %v914
        %1124 = vmatpush1.bf16.msra.mxu0 %v913
        %1125 = vmatprep.subr.bf16.mxu0 %v916
        %1126 = vmatpush1.bf16.msra.mxu0 %v915
        %1127 = vmatprep.subr.bf16.mxu0 %v918
        %1128 = vmatpush1.bf16.msra.mxu0 %v917
        %1129 = vmatprep.subr.bf16.mxu0 %v920
        %1130 = vmatpush1.bf16.msra.mxu0 %v919
        %1131 = vmatprep.mubr.bf16.mxu0 %v428
        %1132 = vmatmul.mubr.bf16.gmra.mrb[0].mxu0 %v427
        %v1133 = vpop.f32.mrb[0].mxu0
        %v1134 = vadd.f32 %v1093, %v1133
        %v1135 = vpop.f32.mrb[0].mxu0
        %v1136 = vadd.f32 %v1095, %v1135
        %v1137 = vpop.f32.mrb[0].mxu0
        %v1138 = vpop.f32.mrb[0].mxu0
        %1139 = vdwg.mxu0
        %v1140 = vmax.f32 %v1134, 0.0
        %v1141 = vmax.f32 %v1136, 0.0
        %v1142 = vld [vmem:[#allocation2] sm:$0x3]
        %v1143 = vld [vmem:[%s380] sm:$0xff]
        %v1144 = vld [vmem:[%s380 + $0x8] sm:$0xff]
        %v1145 = vld [vmem:[%s380 + $0x10] sm:$0xff]
        %v1146 = vld [vmem:[%s380 + $0x18] sm:$0xff]
        %v1147 = vld [vmem:[%s380 + $0x20] sm:$0xff]
        %v1148 = vld [vmem:[%s380 + $0x28] sm:$0xff]
        %v1149 = vld [vmem:[%s380 + $0x30] sm:$0xff]
        %v1150 = vld [vmem:[%s380 + $0x38] sm:$0xff]
        %v1151 = vld [vmem:[%s380 + $0x40] sm:$0xff]
        %v1152 = vld [vmem:[%s380 + $0x48] sm:$0xff]
        %v1153 = vld [vmem:[%s380 + $0x50] sm:$0xff]
        %v1154 = vld [vmem:[%s380 + $0x58] sm:$0xff]
        %v1155 = vld [vmem:[%s380 + $0x60] sm:$0xff]
        %v1156 = vld [vmem:[%s380 + $0x68] sm:$0xff]
        %v1157 = vld [vmem:[%s380 + $0x70] sm:$0xff]
        %v1158 = vld [vmem:[%s380 + $0x78] sm:$0xff]
        %v1159 = vld [vmem:[%s380 + $0x80] sm:$0xff]
        %v1160 = vld [vmem:[%s380 + $0x88] sm:$0xff]
        %v1161 = vld [vmem:[%s380 + $0x90] sm:$0xff]
        %v1162 = vld [vmem:[%s380 + $0x98] sm:$0xff]
        %v1163 = vld [vmem:[%s380 + $0xa0] sm:$0xff]
        %v1164 = vld [vmem:[%s380 + $0xa8] sm:$0xff]
        %v1165 = vld [vmem:[%s380 + $0xb0] sm:$0xff]
        %v1166 = vld [vmem:[%s380 + $0xb8] sm:$0xff]
        %v1167 = vld [vmem:[%s380 + $0xc0] sm:$0xff]
        %v1168 = vld [vmem:[%s380 + $0xc8] sm:$0xff]
        %v1169 = vld [vmem:[%s380 + $0xd0] sm:$0xff]
        %v1170 = vld [vmem:[%s380 + $0xd8] sm:$0xff]
        %v1171 = vld [vmem:[%s380 + $0xe0] sm:$0xff]
        %v1172 = vld [vmem:[%s380 + $0xe8] sm:$0xff]
        %v1173 = vld [vmem:[%s380 + $0xf0] sm:$0xff]
        %v1174 = vld [vmem:[%s380 + $0xf8] sm:$0xff]
        %1175 = vmatprep.subr.mxu0 0.0
        %1176 = vmatpush1.msra.mxu0 %v1143
        %1177 = vmatprep.subr.mxu0 0.0
        %1178 = vmatpush1.msra.mxu0 %v1144
        %1179 = vmatprep.subr.mxu0 0.0
        %1180 = vmatpush1.msra.mxu0 %v1145
        %1181 = vmatprep.subr.mxu0 0.0
        %1182 = vmatpush1.msra.mxu0 %v1146
        %1183 = vmatprep.subr.mxu0 0.0
        %1184 = vmatpush1.msra.mxu0 %v1147
        %1185 = vmatprep.subr.mxu0 0.0
        %1186 = vmatpush1.msra.mxu0 %v1148
        %1187 = vmatprep.subr.mxu0 0.0
        %1188 = vmatpush1.msra.mxu0 %v1149
        %1189 = vmatprep.subr.mxu0 0.0
        %1190 = vmatpush1.msra.mxu0 %v1150
        %1191 = vmatprep.subr.mxu0 0.0
        %1192 = vmatpush1.msra.mxu0 %v1151
        %1193 = vmatprep.subr.mxu0 0.0
        %1194 = vmatpush1.msra.mxu0 %v1152
        %1195 = vmatprep.subr.mxu0 0.0
        %1196 = vmatpush1.msra.mxu0 %v1153
        %1197 = vmatprep.subr.mxu0 0.0
        %1198 = vmatpush1.msra.mxu0 %v1154
        %1199 = vmatprep.subr.mxu0 0.0
        %1200 = vmatpush1.msra.mxu0 %v1155
        %1201 = vmatprep.subr.mxu0 0.0
        %1202 = vmatpush1.msra.mxu0 %v1156
        %1203 = vmatprep.subr.mxu0 0.0
        %1204 = vmatpush1.msra.mxu0 %v1157
        %1205 = vmatprep.subr.mxu0 0.0
        %1206 = vmatpush1.msra.mxu0 %v1158
        %1207 = vmatprep.subr.mxu0 0.0
        %1208 = vmatpush1.msra.mxu0 %v1159
        %1209 = vmatprep.subr.mxu0 0.0
        %1210 = vmatpush1.msra.mxu0 %v1160
        %1211 = vmatprep.subr.mxu0 0.0
        %1212 = vmatpush1.msra.mxu0 %v1161
        %1213 = vmatprep.subr.mxu0 0.0
        %1214 = vmatpush1.msra.mxu0 %v1162
        %1215 = vmatprep.subr.mxu0 0.0
        %1216 = vmatpush1.msra.mxu0 %v1163
        %1217 = vmatprep.subr.mxu0 0.0
        %1218 = vmatpush1.msra.mxu0 %v1164
        %1219 = vmatprep.subr.mxu0 0.0
        %1220 = vmatpush1.msra.mxu0 %v1165
        %1221 = vmatprep.subr.mxu0 0.0
        %1222 = vmatpush1.msra.mxu0 %v1166
        %1223 = vmatprep.subr.mxu0 0.0
        %1224 = vmatpush1.msra.mxu0 %v1167
        %1225 = vmatprep.subr.mxu0 0.0
        %1226 = vmatpush1.msra.mxu0 %v1168
        %1227 = vmatprep.subr.mxu0 0.0
        %1228 = vmatpush1.msra.mxu0 %v1169
        %1229 = vmatprep.subr.mxu0 0.0
        %1230 = vmatpush1.msra.mxu0 %v1170
        %1231 = vmatprep.subr.mxu0 0.0
        %1232 = vmatpush1.msra.mxu0 %v1171
        %1233 = vmatprep.subr.mxu0 0.0
        %1234 = vmatpush1.msra.mxu0 %v1172
        %1235 = vmatprep.subr.mxu0 0.0
        %1236 = vmatpush1.msra.mxu0 %v1173
        %1237 = vmatprep.subr.mxu0 0.0
        %1238 = vmatpush1.msra.mxu0 %v1174
        %1239 = vmatprep.mubr.f32.mxu0 %v1141
        %1240 = vmatmul.mubr.f32.gmra.mrb[0].mxu0 %v1140
        %v1241 = vpop.f32.mrb[0].mxu0
        %v1242 = vadd.f32 0.0, %v1241
        %v1243 = vpop.f32.mrb[0].mxu0
        %1244 = vdwg.mxu0
        %v1245 = vadd.f32 %v1142, %v1242
        %vm1246 = vcmask 156672
        %1247 = vst.msk [vmem:[#allocation2] sm:$0x3] %vm1246, %v1245
        %p1248 = scmp.eq.s32.totalorder %s24, 3
        // Predicated region
        $region73: #{tpu_custom_call.1} parent=47 // pred_check
          %p1249 = pneg %p1248
        $region74: #{tpu_custom_call.1} parent=47 // pred_check_branch
          %1251 = sbr.rel (%p1249) target = $region76
        $region75: #{tpu_custom_call.1} parent=47 // pred_region
          %v1252 = vld [vmem:[#allocation2] sm:$0x3]
          %v1253 = vld [vmem:[#allocation9] sm:$0x1]
          %v1255 = vlaneseq
          %v1256 = vshrl.u32 %v1255, 7
          %v1257 = vsub.s32 0, %v1256
          %v1258 = vrot.slane %v1253, %v1257
          %v1260 = vadd.f32 %v1252, %v1258
          %v1261 = vmax.f32 %v1260, 0.0
          %v1262 = vld [vmem:[%s5] sm:$0xff]
          %v1263 = vld [vmem:[%s5 + $0x8] sm:$0xff]
          %v1264 = vld [vmem:[%s5 + $0x10] sm:$0xf]
          %v1265 = vld [vmem:[#allocation11] sm:$0x1]
          %v1267 = vlaneseq
          %v1268 = vshrl.u32 %v1267, 7
          %v1269 = vsub.s32 0, %v1268
          %v1270 = vrot.slane %v1265, %v1269
          %vm1272 = vcmask 162816
          %v1274 = vsel %vm1272, %v1261, 0
          %vm1276 = vcmask 1043456
          %v1278 = vsel %vm1276, %v1264, 0
          %1280 = vmatprep.subr.mxu0 0.0
          %1281 = vmatpush1.msra.mxu0 %v1262
          %1282 = vmatprep.subr.mxu0 0.0
          %1283 = vmatpush1.msra.mxu0 %v1263
          %1284 = vmatprep.subr.mxu0 0.0
          %1285 = vmatpush1.msra.mxu0 %v1278
          %1286 = vmatprep.subr.mxu0 0.0
          %1287 = vmatpush1.msra.mxu0 0.0
          %1288 = vmatprep.subr.mxu0 0.0
          %1289 = vmatpush1.msra.mxu0 0.0
          %1290 = vmatprep.subr.mxu0 0.0
          %1291 = vmatpush1.msra.mxu0 0.0
          %1292 = vmatprep.subr.mxu0 0.0
          %1293 = vmatpush1.msra.mxu0 0.0
          %1294 = vmatprep.subr.mxu0 0.0
          %1295 = vmatpush1.msra.mxu0 0.0
          %1296 = vmatprep.subr.mxu0 0.0
          %1297 = vmatpush1.msra.mxu0 0.0
          %1298 = vmatprep.subr.mxu0 0.0
          %1299 = vmatpush1.msra.mxu0 0.0
          %1300 = vmatprep.subr.mxu0 0.0
          %1301 = vmatpush1.msra.mxu0 0.0
          %1302 = vmatprep.subr.mxu0 0.0
          %1303 = vmatpush1.msra.mxu0 0.0
          %1304 = vmatprep.subr.mxu0 0.0
          %1305 = vmatpush1.msra.mxu0 0.0
          %1306 = vmatprep.subr.mxu0 0.0
          %1307 = vmatpush1.msra.mxu0 0.0
          %1308 = vmatprep.subr.mxu0 0.0
          %1309 = vmatpush1.msra.mxu0 0.0
          %1310 = vmatprep.subr.mxu0 0.0
          %1311 = vmatpush1.msra.mxu0 0.0
          %1312 = vmatprep.subr.mxu0 0.0
          %1313 = vmatpush1.msra.mxu0 0.0
          %1314 = vmatprep.subr.mxu0 0.0
          %1315 = vmatpush1.msra.mxu0 0.0
          %1316 = vmatprep.subr.mxu0 0.0
          %1317 = vmatpush1.msra.mxu0 0.0
          %1318 = vmatprep.subr.mxu0 0.0
          %1319 = vmatpush1.msra.mxu0 0.0
          %1320 = vmatprep.subr.mxu0 0.0
          %1321 = vmatpush1.msra.mxu0 0.0
          %1322 = vmatprep.subr.mxu0 0.0
          %1323 = vmatpush1.msra.mxu0 0.0
          %1324 = vmatprep.subr.mxu0 0.0
          %1325 = vmatpush1.msra.mxu0 0.0
          %1326 = vmatprep.subr.mxu0 0.0
          %1327 = vmatpush1.msra.mxu0 0.0
          %1328 = vmatprep.subr.mxu0 0.0
          %1329 = vmatpush1.msra.mxu0 0.0
          %1330 = vmatprep.subr.mxu0 0.0
          %1331 = vmatpush1.msra.mxu0 0.0
          %1332 = vmatprep.subr.mxu0 0.0
          %1333 = vmatpush1.msra.mxu0 0.0
          %1334 = vmatprep.subr.mxu0 0.0
          %1335 = vmatpush1.msra.mxu0 0.0
          %1336 = vmatprep.subr.mxu0 0.0
          %1337 = vmatpush1.msra.mxu0 0.0
          %1338 = vmatprep.subr.mxu0 0.0
          %1339 = vmatpush1.msra.mxu0 0.0
          %1340 = vmatprep.subr.mxu0 0.0
          %1341 = vmatpush1.msra.mxu0 0.0
          %1342 = vmatprep.subr.mxu0 0.0
          %1343 = vmatpush1.msra.mxu0 0.0
          %1344 = vmatprep.mubr.f32.mxu0 0.0
          %1345 = vmatmul.mubr.f32.gmra.mrb[0].mxu0 %v1274
          %v1346 = vpop.f32.mrb[0].mxu0
          %v1347 = vadd.f32 %v1270, %v1346
          %v1348 = vpop.f32.mrb[0].mxu0
          %1349 = vdwg.mxu0
          %v1350 = vlaneseq
          %v1351 = vand.u32 %v1350, 127
          %vm1352 = vcmp.lt.s32.totalorder %v1351, 0
          %v1353 = vsub.s32 0, %v1351
          %v1354 = vsel %vm1352, %v1353, %v1351
          %v1355 = vmul.u32.u64.compose %v1354, 2863311531
          %v1356 = vextract.low.u32 %v1355
          %v1357 = vextract.high.u32 %v1355
          %v1358 = vshrl.u32 %v1357, 1
          %v1359 = vmul.u32 %v1358, 3
          %v1360 = vsub.s32 %v1354, %v1359
          %v1361 = vsub.s32 0, %v1360
          %v1362 = vsel %vm1352, %v1361, %v1360
          %vm1363 = vcmp.ne.s32.totalorder %v1362, 0
          %vm1364 = vcmp.lt.s32.totalorder %v1362, 0
          %vm1365 = vmand %vm1364, %vm1363
          %v1366 = vadd.s32 %v1362, 3
          %v1367 = vsel %vm1365, %v1366, %v1362
          %vm1368 = vcmp.ne.s32.totalorder %v1367, 2
          %v1369 = vtanh.pop %v1347
          %v1370 = vsel %vm1368, %v1369, %v1347
          %vm1371 = vcmask 41984
          %1372 = vst.msk [vmem:[#allocation12] sm:$0x3] %vm1371, %v1370
        $region76: #{tpu_custom_call.1} parent=47 // pred_fallthru
          _
        // Predicated region
        $region77: #{tpu_custom_call.1} parent=47 // pred_check
          %p1373 = pneg %p199
        $region78: #{tpu_custom_call.1} parent=47 // pred_check_branch
          %1375 = sbr.rel (%p1373) target = $region80
        $region79: #{tpu_custom_call.1} parent=47 // pred_region
          %s1377 = ssub.s32 32, 32
          %1378 = vsyncadd [#allocation5], %s1377
          %s1380 = sshll.u32 [#allocation12], 4
          %s1381 = int_to_ptr.vmem [resolvable:$true] %s1380
          %1383 = dma.vmem_to_hbm [thread:$0]  %s1381, 32, %s7, [#allocation5]
        $region80: #{tpu_custom_call.1} parent=47 // pred_fallthru
          _
        // Predicated region
        $region81: #{tpu_custom_call.1} parent=47 // pred_check
          %p1384 = pneg %p199
        $region82: #{tpu_custom_call.1} parent=47 // pred_check_branch
          %1386 = sbr.rel (%p1384) target = $region84
        $region83: #{tpu_custom_call.1} parent=47 // pred_region
          %1387 = dma.done [#allocation5], 32
        $region84: #{tpu_custom_call.1} parent=47 // pred_fallthru
          _
      $region48: #{tpu_custom_call.1} parent=5 // pred_fallthru
        _
      %p1388 = scmp.le.s32.totalorder 2, %s19
      // Predicated region
      $region85: #{tpu_custom_call.1} parent=5 // pred_check
        %p1389 = pneg %p1388
      $region86: #{tpu_custom_call.1} parent=5 // pred_check_branch
        %1391 = sbr.rel (%p1389) target = $region88
      $region87: #{tpu_custom_call.1} parent=5 // pred_region
        %s1392 = ssub.s32 %s19, 2
      $region88: #{tpu_custom_call.1} parent=5 // pred_fallthru
        _
    $region6: #{tpu_custom_call.1} parent=1 // loop_footer
      %s23 = sadd.s32 1, %s19
    $region7: #{tpu_custom_call.1} parent=1 // loop_footer_branch
      %18 = sbr.rel target = $region3
    $region8: #{tpu_custom_call.1} parent=1 // loop_exit
      _
    %1393 = vsyncpa [#allocation4], 1
    %s1394 = scalar_lea.sflag [#allocation4], 1
    %1395 = vsyncpa %s1394, 1
    %1396 = vsyncpa [#allocation7], 1
    %s1397 = scalar_lea.sflag [#allocation7], 1
    %1398 = vsyncpa %s1397, 1
    %1399 = vsyncpa [#allocation10], 1
    %1400 = vsyncpa [#allocation5], 1
    %s1401 = scalar_lea.sflag [#allocation5], 1
    %1402 = vsyncpa %s1401, 1

</llo_original>
